<compile_context>
chip_gen: v6e
topology: v6e:2x2x1
jax: 0.10.0
libtpu: 0.0.40
codegen_flags: <defaults>
</compile_context>

<pallas_src>
import functools

import jax
import jax.numpy as jnp
from jax.experimental import pallas as pl
from jax.experimental.pallas import tpu as pltpu

LANES = 128


def _laughter_lstm_kernel(x_ref, wih_ref, whh_ref, b_ref, wlp_ref, blp_ref,
                          o_ref, *, seq_len, batch_pad, hidden_dim):
    """Whole forward pass in one invocation.

    x_ref   : (T*Bp, I)    time-major, batch-padded inputs (row = t*Bp + b)
    wih_ref : (I, 4H)      W_ih^T, gate cols [i,f,o,g]; i/f/o pre-scaled by 0.5
    whh_ref : (4H, 4H)     rows [0:H] = W_hh^T (same order/scaling), rest zero
    b_ref   : (1, 4H)      (b_ih+b_hh), same order/scaling
    wlp_ref : (4H, 128)    rows [0:H]: lane0 = w1-w0, lane1 = -(w1-w0); rest 0
    blp_ref : (1, 128)     matching bias difference
    o_ref   : (T*Bp, 128)  lanes 0/1 = log-probs, other lanes padding
    """
    T, Bp, H = seq_len, batch_pad, hidden_dim
    G = 4 * H

    # Hoisted input projection (bias fused): one big MXU matmul off the chain.
    xw = (jnp.dot(x_ref[...], wih_ref[...], preferred_element_type=jnp.float32)
          + b_ref[...])                                      # (T*Bp, 4H)
    whh = whh_ref[...]                                       # (4H, 4H), hoisted

    # Per-lane affine turning tanh(z/2) into sigmoid(z) on the i/f/o blocks.
    # Built once, at full (Bp, 4H) shape so no broadcast op inside the loop.
    lane = jax.lax.broadcasted_iota(jnp.int32, (Bp, G), 1)
    is_sig = lane < 3 * H
    g_scale = jnp.where(is_sig, 0.5, 1.0).astype(jnp.float32)
    g_shift = jnp.where(is_sig, 0.5, 0.0).astype(jnp.float32)

    # State carried as full-width vregs: lanes [0:H] hold h / c, the remaining
    # lanes hold bounded junk that the zero weight rows annihilate exactly.
    h_vec = jnp.zeros((Bp, G), jnp.float32)
    c_vec = jnp.zeros((Bp, G), jnp.float32)

    hs = []
    for t in range(T):                                       # T=8: full unroll
        z = xw[t * Bp:(t + 1) * Bp, :] + jnp.dot(
            h_vec, whh, preferred_element_type=jnp.float32)  # (Bp, 4H) [i|f|o|g]
        t_all = jnp.tanh(z)                                  # ONE EUP launch
        act = t_all * g_scale + g_shift                      # [si|sf|so|tg]
        # Three independent rolls of the same vreg -> overlap on the XLU.
        r_f = pltpu.roll(act, shift=3 * H, axis=1)           # lanes[0:H] = sf
        r_g = pltpu.roll(act, shift=H, axis=1)               # lanes[0:H] = tg
        r_o = pltpu.roll(act, shift=2 * H, axis=1)           # lanes[0:H] = so
        c_vec = r_f * c_vec + act * r_g                      # [0:H] = f*c + i*g
        h_vec = r_o * jnp.tanh(c_vec)                        # [0:H] = o*tanh(c)
        hs.append(h_vec)

    # Register-stacked hidden states -> single lane-dense classifier matmul.
    hs_all = jnp.concatenate(hs, axis=0)                     # (T*Bp, 4H)
    d = (jnp.dot(hs_all, wlp_ref[...], preferred_element_type=jnp.float32)
         + blp_ref[...])                                     # lane0=z1-z0, lane1=-(z1-z0)
    # Closed-form 2-class log_softmax: logp_k = -softplus(d_k).
    o_ref[...] = -(jnp.maximum(d, 0.0) + jnp.log(1.0 + jnp.exp(-jnp.abs(d))))


def prepare_laughter_lstm_params(w_ih, w_hh, b_ih, b_hh, w_out, b_out):
    """One-time parameter preprocessing (call at load time, NOT per forward).

    w_ih : (4H, I), w_hh : (4H, H), b_ih/b_hh : (4H,)  [PyTorch i,f,g,o order]
    w_out: (2, H),  b_out: (2,)
    """
    H = w_hh.shape[1]
    G = 4 * H
    f32 = jnp.float32

    # PyTorch gate order [i, f, g, o] -> [i, f, o, g] (sigmoid gates contiguous).
    perm = jnp.concatenate([jnp.arange(0, H), jnp.arange(H, 2 * H),
                            jnp.arange(3 * H, 4 * H), jnp.arange(2 * H, 3 * H)])
    # Bake the sigmoid->tanh 0.5 factor into the i/f/o columns AND their bias.
    col_scale = jnp.concatenate([jnp.full((3 * H,), 0.5, f32),
                                 jnp.ones((H,), f32)])

    wih_t = jnp.transpose(w_ih[perm]).astype(f32) * col_scale       # (I, 4H)
    whh_t = jnp.transpose(w_hh[perm]).astype(f32) * col_scale       # (H, 4H)
    whh_pad = jnp.zeros((G, G), f32).at[:H, :].set(whh_t)           # zero rows H:4H
    b = ((b_ih + b_hh)[perm].astype(f32) * col_scale).reshape(1, G)

    # Lane-dense classifier / closed-form log_softmax weight, zero-row padded.
    wd = (w_out[1] - w_out[0]).astype(f32)                          # (H,)
    bd = (b_out[1] - b_out[0]).astype(f32)
    wlp_pad = (jnp.zeros((G, LANES), f32)
               .at[:H, 0].set(wd).at[:H, 1].set(-wd))
    blp = jnp.zeros((1, LANES), f32).at[0, 0].set(bd).at[0, 1].set(-bd)

    return {"wih_t": wih_t, "whh_pad": whh_pad, "b": b,
            "wlp_pad": wlp_pad, "blp": blp}


@jax.jit
def laughter_lstm_forward(x_btd, params):
    """Per-call forward pass. x_btd: (B, T, I) float32 -> (B, T, 2) log-probs."""
    wih_t, whh_pad = params["wih_t"], params["whh_pad"]
    b, wlp_pad, blp = params["b"], params["wlp_pad"], params["blp"]

    B, T, I = x_btd.shape
    G = whh_pad.shape[0]
    H = G // 4
    Bp = max(8, ((B + 7) // 8) * 8)          # sublane-pad the batch
    f32 = jnp.float32

    # Time-major, batch-padded, flattened input: row index = t * Bp + b.
    x_tbd = jnp.transpose(x_btd, (1, 0, 2)).astype(f32)             # (T, B, I)
    x_pad = jnp.zeros((T, Bp, I), f32).at[:, :B, :].set(x_tbd)
    x_flat = x_pad.reshape(T * Bp, I)

    kernel = functools.partial(_laughter_lstm_kernel, seq_len=T,
                               batch_pad=Bp, hidden_dim=H)

    out_pad = pl.pallas_call(
        kernel,
        out_shape=jax.ShapeDtypeStruct((T * Bp, LANES), f32),
        in_specs=[pl.BlockSpec(memory_space=pltpu.MemorySpace.VMEM)] * 6,
        out_specs=pl.BlockSpec(memory_space=pltpu.MemorySpace.VMEM),
    )(x_flat, wih_t, whh_pad, b, wlp_pad, blp)

    logp = out_pad.reshape(T, Bp, LANES)[:, :B, :2]                 # (T, B, 2)
    return jnp.transpose(logp, (1, 0, 2))                           # (B, T, 2)


# ------------------------- pure-JAX reference -------------------------

def _reference_forward(x_btd, w_ih, w_hh, b_ih, b_hh, w_out, b_out):
    B, T, I = x_btd.shape
    H = w_hh.shape[1]

    def step(carry, x_t):
        h, c = carry
        gates = x_t @ w_ih.T + h @ w_hh.T + b_ih + b_hh
        i = jax.nn.sigmoid(gates[:, 0 * H:1 * H])
        f = jax.nn.sigmoid(gates[:, 1 * H:2 * H])
        g = jnp.tanh(gates[:, 2 * H:3 * H])
        o = jax.nn.sigmoid(gates[:, 3 * H:4 * H])
        c = f * c + i * g
        h = o * jnp.tanh(c)
        return (h, c), h

    x_tbd = jnp.transpose(x_btd, (1, 0, 2))
    (_, _), hs = jax.lax.scan(step, (jnp.zeros((B, H)), jnp.zeros((B, H))), x_tbd)
    logits = hs @ w_out.T + b_out                                   # (T, B, 2)
    logp = jax.nn.log_softmax(logits, axis=-1)
    return jnp.transpose(logp, (1, 0, 2))


if __name__ == "__main__":
    # Small shapes consistent with the module: batch=2, seq=8, input=16, hidden=32.
    B, T, I, H = 2, 8, 16, 32

    key = jax.random.PRNGKey(0)
    k = jax.random.split(key, 8)
    scale = 1.0 / jnp.sqrt(H)

    x = jax.random.normal(k[0], (B, T, I), dtype=jnp.float32)
    w_ih = jax.random.uniform(k[1], (4 * H, I), minval=-scale, maxval=scale)
    w_hh = jax.random.uniform(k[2], (4 * H, H), minval=-scale, maxval=scale)
    b_ih = jax.random.uniform(k[3], (4 * H,), minval=-scale, maxval=scale)
    b_hh = jax.random.uniform(k[4], (4 * H,), minval=-scale, maxval=scale)
    w_out = jax.random.uniform(k[5], (2, H), minval=-scale, maxval=scale)
    b_out = jax.random.uniform(k[6], (2,), minval=-scale, maxval=scale)

    # One-time preprocessing, hoisted out of the per-call forward path.
    params = jax.tree_util.tree_map(jax.block_until_ready,
                                    prepare_laughter_lstm_params(
                                        w_ih, w_hh, b_ih, b_hh, w_out, b_out))

    out = laughter_lstm_forward(x, params)
    out = jax.block_until_ready(out)

    ref = _reference_forward(x, w_ih, w_hh, b_ih, b_hh, w_out, b_out)
    assert out.shape == (B, T, 2)
    # Tolerance covers the tanh-vs-exp sigmoid formulation and MXU default
    # (bf16-pass) precision differences between kernel and XLA reference;
    # structural bugs (gate order, rolls, softmax) would be >1e-1 off.
    assert bool(jnp.all(jnp.isfinite(out)))
    assert jnp.allclose(out, ref, atol=5e-3, rtol=5e-3)

    print("KERNEL_OK")
</pallas_src>

<mosaic_0001>
module attributes {stable_mosaic.version = 11 : i64} {
  func.func @_laughter_lstm_kernel(%arg0: memref<64x16xf32, #tpu.memory_space<vmem>>, %arg1: memref<16x128xf32, #tpu.memory_space<vmem>>, %arg2: memref<128x128xf32, #tpu.memory_space<vmem>>, %arg3: memref<1x128xf32, #tpu.memory_space<vmem>>, %arg4: memref<128x128xf32, #tpu.memory_space<vmem>>, %arg5: memref<1x128xf32, #tpu.memory_space<vmem>>, %arg6: memref<64x128xf32, #tpu.memory_space<vmem>>) attributes {dimension_semantics = [], scalar_prefetch = 0 : i64, scratch_operands = 0 : i64, tpu.core_type = #tpu.core_type<tc>} {
    %c0 = arith.constant 0 : index
    %c0_0 = arith.constant 0 : index
    %0 = vector.load %arg0[%c0, %c0_0] : memref<64x16xf32, #tpu.memory_space<vmem>>, vector<64x16xf32>
    %c0_1 = arith.constant 0 : index
    %c0_2 = arith.constant 0 : index
    %1 = vector.load %arg1[%c0_1, %c0_2] : memref<16x128xf32, #tpu.memory_space<vmem>>, vector<16x128xf32>
    %cst = arith.constant dense<0.000000e+00> : vector<64x128xf32>
    %2 = tpu.matmul %0, %1, %cst {dimension_numbers = #tpu.dot_dimension_numbers<[1], [0], [0], [1], [0, 0, 1, 1], [], []>} : vector<64x16xf32>, vector<16x128xf32>, vector<64x128xf32> -> vector<64x128xf32>
    %c0_3 = arith.constant 0 : index
    %c0_4 = arith.constant 0 : index
    %3 = vector.load %arg3[%c0_3, %c0_4] : memref<1x128xf32, #tpu.memory_space<vmem>>, vector<1x128xf32>
    %4 = vector.broadcast %3 : vector<1x128xf32> to vector<64x128xf32>
    %5 = arith.addf %2, %4 : vector<64x128xf32>
    %c0_5 = arith.constant 0 : index
    %c0_6 = arith.constant 0 : index
    %6 = vector.load %arg2[%c0_5, %c0_6] : memref<128x128xf32, #tpu.memory_space<vmem>>, vector<128x128xf32>
    %7 = tpu.iota {dimensions = array<i32: 1>} : vector<8x128xi32>
    %c96_i32 = arith.constant 96 : i32
    %8 = vector.broadcast %c96_i32 : i32 to vector<8x128xi32>
    %9 = arith.cmpi slt, %7, %8 : vector<8x128xi32>
    %cst_7 = arith.constant 5.000000e-01 : f32
    %cst_8 = arith.constant 1.000000e+00 : f32
    %10 = vector.broadcast %cst_7 : f32 to vector<8x128xf32>
    %11 = vector.broadcast %cst_8 : f32 to vector<8x128xf32>
    %12 = arith.select %9, %10, %11 : vector<8x128xi1>, vector<8x128xf32>
    %cst_9 = arith.constant 5.000000e-01 : f32
    %cst_10 = arith.constant 0.000000e+00 : f32
    %13 = vector.broadcast %cst_9 : f32 to vector<8x128xf32>
    %14 = vector.broadcast %cst_10 : f32 to vector<8x128xf32>
    %15 = arith.select %9, %13, %14 : vector<8x128xi1>, vector<8x128xf32>
    %cst_11 = arith.constant 0.000000e+00 : f32
    %16 = vector.broadcast %cst_11 : f32 to vector<8x128xf32>
    %cst_12 = arith.constant 0.000000e+00 : f32
    %17 = vector.broadcast %cst_12 : f32 to vector<8x128xf32>
    %18 = vector.extract_strided_slice %5 {offsets = [0, 0], sizes = [8, 128], strides = [1, 1]} : vector<64x128xf32> to vector<8x128xf32>
    %cst_13 = arith.constant dense<0.000000e+00> : vector<8x128xf32>
    %19 = tpu.matmul %16, %6, %cst_13 {dimension_numbers = #tpu.dot_dimension_numbers<[1], [0], [0], [1], [0, 0, 1, 1], [], []>} : vector<8x128xf32>, vector<128x128xf32>, vector<8x128xf32> -> vector<8x128xf32>
    %20 = arith.addf %18, %19 : vector<8x128xf32>
    %21 = math.tanh %20 : vector<8x128xf32>
    %22 = arith.mulf %21, %12 : vector<8x128xf32>
    %23 = arith.addf %22, %15 : vector<8x128xf32>
    %c96_i32_14 = arith.constant 96 : i32
    %24 = tpu.dynamic_rotate %23 by %c96_i32_14 dim 1 : vector<8x128xf32>, i32 -> vector<8x128xf32>
    %c32_i32 = arith.constant 32 : i32
    %25 = tpu.dynamic_rotate %23 by %c32_i32 dim 1 : vector<8x128xf32>, i32 -> vector<8x128xf32>
    %c64_i32 = arith.constant 64 : i32
    %26 = tpu.dynamic_rotate %23 by %c64_i32 dim 1 : vector<8x128xf32>, i32 -> vector<8x128xf32>
    %27 = arith.mulf %24, %17 : vector<8x128xf32>
    %28 = arith.mulf %23, %25 : vector<8x128xf32>
    %29 = arith.addf %27, %28 : vector<8x128xf32>
    %30 = math.tanh %29 : vector<8x128xf32>
    %31 = arith.mulf %26, %30 : vector<8x128xf32>
    %32 = vector.extract_strided_slice %5 {offsets = [8, 0], sizes = [8, 128], strides = [1, 1]} : vector<64x128xf32> to vector<8x128xf32>
    %cst_15 = arith.constant dense<0.000000e+00> : vector<8x128xf32>
    %33 = tpu.matmul %31, %6, %cst_15 {dimension_numbers = #tpu.dot_dimension_numbers<[1], [0], [0], [1], [0, 0, 1, 1], [], []>} : vector<8x128xf32>, vector<128x128xf32>, vector<8x128xf32> -> vector<8x128xf32>
    %34 = arith.addf %32, %33 : vector<8x128xf32>
    %35 = math.tanh %34 : vector<8x128xf32>
    %36 = arith.mulf %35, %12 : vector<8x128xf32>
    %37 = arith.addf %36, %15 : vector<8x128xf32>
    %c96_i32_16 = arith.constant 96 : i32
    %38 = tpu.dynamic_rotate %37 by %c96_i32_16 dim 1 : vector<8x128xf32>, i32 -> vector<8x128xf32>
    %c32_i32_17 = arith.constant 32 : i32
    %39 = tpu.dynamic_rotate %37 by %c32_i32_17 dim 1 : vector<8x128xf32>, i32 -> vector<8x128xf32>
    %c64_i32_18 = arith.constant 64 : i32
    %40 = tpu.dynamic_rotate %37 by %c64_i32_18 dim 1 : vector<8x128xf32>, i32 -> vector<8x128xf32>
    %41 = arith.mulf %38, %29 : vector<8x128xf32>
    %42 = arith.mulf %37, %39 : vector<8x128xf32>
    %43 = arith.addf %41, %42 : vector<8x128xf32>
    %44 = math.tanh %43 : vector<8x128xf32>
    %45 = arith.mulf %40, %44 : vector<8x128xf32>
    %46 = vector.extract_strided_slice %5 {offsets = [16, 0], sizes = [8, 128], strides = [1, 1]} : vector<64x128xf32> to vector<8x128xf32>
    %cst_19 = arith.constant dense<0.000000e+00> : vector<8x128xf32>
    %47 = tpu.matmul %45, %6, %cst_19 {dimension_numbers = #tpu.dot_dimension_numbers<[1], [0], [0], [1], [0, 0, 1, 1], [], []>} : vector<8x128xf32>, vector<128x128xf32>, vector<8x128xf32> -> vector<8x128xf32>
    %48 = arith.addf %46, %47 : vector<8x128xf32>
    %49 = math.tanh %48 : vector<8x128xf32>
    %50 = arith.mulf %49, %12 : vector<8x128xf32>
    %51 = arith.addf %50, %15 : vector<8x128xf32>
    %c96_i32_20 = arith.constant 96 : i32
    %52 = tpu.dynamic_rotate %51 by %c96_i32_20 dim 1 : vector<8x128xf32>, i32 -> vector<8x128xf32>
    %c32_i32_21 = arith.constant 32 : i32
    %53 = tpu.dynamic_rotate %51 by %c32_i32_21 dim 1 : vector<8x128xf32>, i32 -> vector<8x128xf32>
    %c64_i32_22 = arith.constant 64 : i32
    %54 = tpu.dynamic_rotate %51 by %c64_i32_22 dim 1 : vector<8x128xf32>, i32 -> vector<8x128xf32>
    %55 = arith.mulf %52, %43 : vector<8x128xf32>
    %56 = arith.mulf %51, %53 : vector<8x128xf32>
    %57 = arith.addf %55, %56 : vector<8x128xf32>
    %58 = math.tanh %57 : vector<8x128xf32>
    %59 = arith.mulf %54, %58 : vector<8x128xf32>
    %60 = vector.extract_strided_slice %5 {offsets = [24, 0], sizes = [8, 128], strides = [1, 1]} : vector<64x128xf32> to vector<8x128xf32>
    %cst_23 = arith.constant dense<0.000000e+00> : vector<8x128xf32>
    %61 = tpu.matmul %59, %6, %cst_23 {dimension_numbers = #tpu.dot_dimension_numbers<[1], [0], [0], [1], [0, 0, 1, 1], [], []>} : vector<8x128xf32>, vector<128x128xf32>, vector<8x128xf32> -> vector<8x128xf32>
    %62 = arith.addf %60, %61 : vector<8x128xf32>
    %63 = math.tanh %62 : vector<8x128xf32>
    %64 = arith.mulf %63, %12 : vector<8x128xf32>
    %65 = arith.addf %64, %15 : vector<8x128xf32>
    %c96_i32_24 = arith.constant 96 : i32
    %66 = tpu.dynamic_rotate %65 by %c96_i32_24 dim 1 : vector<8x128xf32>, i32 -> vector<8x128xf32>
    %c32_i32_25 = arith.constant 32 : i32
    %67 = tpu.dynamic_rotate %65 by %c32_i32_25 dim 1 : vector<8x128xf32>, i32 -> vector<8x128xf32>
    %c64_i32_26 = arith.constant 64 : i32
    %68 = tpu.dynamic_rotate %65 by %c64_i32_26 dim 1 : vector<8x128xf32>, i32 -> vector<8x128xf32>
    %69 = arith.mulf %66, %57 : vector<8x128xf32>
    %70 = arith.mulf %65, %67 : vector<8x128xf32>
    %71 = arith.addf %69, %70 : vector<8x128xf32>
    %72 = math.tanh %71 : vector<8x128xf32>
    %73 = arith.mulf %68, %72 : vector<8x128xf32>
    %74 = vector.extract_strided_slice %5 {offsets = [32, 0], sizes = [8, 128], strides = [1, 1]} : vector<64x128xf32> to vector<8x128xf32>
    %cst_27 = arith.constant dense<0.000000e+00> : vector<8x128xf32>
    %75 = tpu.matmul %73, %6, %cst_27 {dimension_numbers = #tpu.dot_dimension_numbers<[1], [0], [0], [1], [0, 0, 1, 1], [], []>} : vector<8x128xf32>, vector<128x128xf32>, vector<8x128xf32> -> vector<8x128xf32>
    %76 = arith.addf %74, %75 : vector<8x128xf32>
    %77 = math.tanh %76 : vector<8x128xf32>
    %78 = arith.mulf %77, %12 : vector<8x128xf32>
    %79 = arith.addf %78, %15 : vector<8x128xf32>
    %c96_i32_28 = arith.constant 96 : i32
    %80 = tpu.dynamic_rotate %79 by %c96_i32_28 dim 1 : vector<8x128xf32>, i32 -> vector<8x128xf32>
    %c32_i32_29 = arith.constant 32 : i32
    %81 = tpu.dynamic_rotate %79 by %c32_i32_29 dim 1 : vector<8x128xf32>, i32 -> vector<8x128xf32>
    %c64_i32_30 = arith.constant 64 : i32
    %82 = tpu.dynamic_rotate %79 by %c64_i32_30 dim 1 : vector<8x128xf32>, i32 -> vector<8x128xf32>
    %83 = arith.mulf %80, %71 : vector<8x128xf32>
    %84 = arith.mulf %79, %81 : vector<8x128xf32>
    %85 = arith.addf %83, %84 : vector<8x128xf32>
    %86 = math.tanh %85 : vector<8x128xf32>
    %87 = arith.mulf %82, %86 : vector<8x128xf32>
    %88 = vector.extract_strided_slice %5 {offsets = [40, 0], sizes = [8, 128], strides = [1, 1]} : vector<64x128xf32> to vector<8x128xf32>
    %cst_31 = arith.constant dense<0.000000e+00> : vector<8x128xf32>
    %89 = tpu.matmul %87, %6, %cst_31 {dimension_numbers = #tpu.dot_dimension_numbers<[1], [0], [0], [1], [0, 0, 1, 1], [], []>} : vector<8x128xf32>, vector<128x128xf32>, vector<8x128xf32> -> vector<8x128xf32>
    %90 = arith.addf %88, %89 : vector<8x128xf32>
    %91 = math.tanh %90 : vector<8x128xf32>
    %92 = arith.mulf %91, %12 : vector<8x128xf32>
    %93 = arith.addf %92, %15 : vector<8x128xf32>
    %c96_i32_32 = arith.constant 96 : i32
    %94 = tpu.dynamic_rotate %93 by %c96_i32_32 dim 1 : vector<8x128xf32>, i32 -> vector<8x128xf32>
    %c32_i32_33 = arith.constant 32 : i32
    %95 = tpu.dynamic_rotate %93 by %c32_i32_33 dim 1 : vector<8x128xf32>, i32 -> vector<8x128xf32>
    %c64_i32_34 = arith.constant 64 : i32
    %96 = tpu.dynamic_rotate %93 by %c64_i32_34 dim 1 : vector<8x128xf32>, i32 -> vector<8x128xf32>
    %97 = arith.mulf %94, %85 : vector<8x128xf32>
    %98 = arith.mulf %93, %95 : vector<8x128xf32>
    %99 = arith.addf %97, %98 : vector<8x128xf32>
    %100 = math.tanh %99 : vector<8x128xf32>
    %101 = arith.mulf %96, %100 : vector<8x128xf32>
    %102 = vector.extract_strided_slice %5 {offsets = [48, 0], sizes = [8, 128], strides = [1, 1]} : vector<64x128xf32> to vector<8x128xf32>
    %cst_35 = arith.constant dense<0.000000e+00> : vector<8x128xf32>
    %103 = tpu.matmul %101, %6, %cst_35 {dimension_numbers = #tpu.dot_dimension_numbers<[1], [0], [0], [1], [0, 0, 1, 1], [], []>} : vector<8x128xf32>, vector<128x128xf32>, vector<8x128xf32> -> vector<8x128xf32>
    %104 = arith.addf %102, %103 : vector<8x128xf32>
    %105 = math.tanh %104 : vector<8x128xf32>
    %106 = arith.mulf %105, %12 : vector<8x128xf32>
    %107 = arith.addf %106, %15 : vector<8x128xf32>
    %c96_i32_36 = arith.constant 96 : i32
    %108 = tpu.dynamic_rotate %107 by %c96_i32_36 dim 1 : vector<8x128xf32>, i32 -> vector<8x128xf32>
    %c32_i32_37 = arith.constant 32 : i32
    %109 = tpu.dynamic_rotate %107 by %c32_i32_37 dim 1 : vector<8x128xf32>, i32 -> vector<8x128xf32>
    %c64_i32_38 = arith.constant 64 : i32
    %110 = tpu.dynamic_rotate %107 by %c64_i32_38 dim 1 : vector<8x128xf32>, i32 -> vector<8x128xf32>
    %111 = arith.mulf %108, %99 : vector<8x128xf32>
    %112 = arith.mulf %107, %109 : vector<8x128xf32>
    %113 = arith.addf %111, %112 : vector<8x128xf32>
    %114 = math.tanh %113 : vector<8x128xf32>
    %115 = arith.mulf %110, %114 : vector<8x128xf32>
    %116 = vector.extract_strided_slice %5 {offsets = [56, 0], sizes = [8, 128], strides = [1, 1]} : vector<64x128xf32> to vector<8x128xf32>
    %cst_39 = arith.constant dense<0.000000e+00> : vector<8x128xf32>
    %117 = tpu.matmul %115, %6, %cst_39 {dimension_numbers = #tpu.dot_dimension_numbers<[1], [0], [0], [1], [0, 0, 1, 1], [], []>} : vector<8x128xf32>, vector<128x128xf32>, vector<8x128xf32> -> vector<8x128xf32>
    %118 = arith.addf %116, %117 : vector<8x128xf32>
    %119 = math.tanh %118 : vector<8x128xf32>
    %120 = arith.mulf %119, %12 : vector<8x128xf32>
    %121 = arith.addf %120, %15 : vector<8x128xf32>
    %c96_i32_40 = arith.constant 96 : i32
    %122 = tpu.dynamic_rotate %121 by %c96_i32_40 dim 1 : vector<8x128xf32>, i32 -> vector<8x128xf32>
    %c32_i32_41 = arith.constant 32 : i32
    %123 = tpu.dynamic_rotate %121 by %c32_i32_41 dim 1 : vector<8x128xf32>, i32 -> vector<8x128xf32>
    %c64_i32_42 = arith.constant 64 : i32
    %124 = tpu.dynamic_rotate %121 by %c64_i32_42 dim 1 : vector<8x128xf32>, i32 -> vector<8x128xf32>
    %125 = arith.mulf %122, %113 : vector<8x128xf32>
    %126 = arith.mulf %121, %123 : vector<8x128xf32>
    %127 = arith.addf %125, %126 : vector<8x128xf32>
    %128 = math.tanh %127 : vector<8x128xf32>
    %129 = arith.mulf %124, %128 : vector<8x128xf32>
    %130 = tpu.concatenate %31, %45, %59, %73, %87, %101, %115, %129 in 0 : vector<8x128xf32>, vector<8x128xf32>, vector<8x128xf32>, vector<8x128xf32>, vector<8x128xf32>, vector<8x128xf32>, vector<8x128xf32>, vector<8x128xf32> -> vector<64x128xf32>
    %c0_43 = arith.constant 0 : index
    %c0_44 = arith.constant 0 : index
    %131 = vector.load %arg4[%c0_43, %c0_44] : memref<128x128xf32, #tpu.memory_space<vmem>>, vector<128x128xf32>
    %cst_45 = arith.constant dense<0.000000e+00> : vector<64x128xf32>
    %132 = tpu.matmul %130, %131, %cst_45 {dimension_numbers = #tpu.dot_dimension_numbers<[1], [0], [0], [1], [0, 0, 1, 1], [], []>} : vector<64x128xf32>, vector<128x128xf32>, vector<64x128xf32> -> vector<64x128xf32>
    %c0_46 = arith.constant 0 : index
    %c0_47 = arith.constant 0 : index
    %133 = vector.load %arg5[%c0_46, %c0_47] : memref<1x128xf32, #tpu.memory_space<vmem>>, vector<1x128xf32>
    %134 = vector.broadcast %133 : vector<1x128xf32> to vector<64x128xf32>
    %135 = arith.addf %132, %134 : vector<64x128xf32>
    %cst_48 = arith.constant 0.000000e+00 : f32
    %136 = vector.broadcast %cst_48 : f32 to vector<64x128xf32>
    %137 = arith.maximumf %135, %136 : vector<64x128xf32>
    %138 = math.absf %135 : vector<64x128xf32>
    %cst_49 = arith.constant 0.000000e+00 : f32
    %139 = vector.broadcast %cst_49 : f32 to vector<64x128xf32>
    %140 = arith.subf %139, %138 : vector<64x128xf32>
    %141 = math.exp %140 : vector<64x128xf32>
    %cst_50 = arith.constant 1.000000e+00 : f32
    %142 = vector.broadcast %cst_50 : f32 to vector<64x128xf32>
    %143 = arith.addf %142, %141 : vector<64x128xf32>
    %144 = math.log %143 : vector<64x128xf32>
    %145 = arith.addf %137, %144 : vector<64x128xf32>
    %cst_51 = arith.constant 0.000000e+00 : f32
    %146 = vector.broadcast %cst_51 : f32 to vector<64x128xf32>
    %147 = arith.subf %146, %145 : vector<64x128xf32>
    %c0_52 = arith.constant 0 : index
    %c0_53 = arith.constant 0 : index
    %148 = vector.load %arg6[%c0_52, %c0_53] : memref<64x128xf32, #tpu.memory_space<vmem>>, vector<64x128xf32>
    tpu.vector_store %arg6[%c0_52, %c0_53], %147 {strides = array<i32>} : memref<64x128xf32, #tpu.memory_space<vmem>>, vector<64x128xf32>,
    return
  }
}

</mosaic_0001>

<llo_original>
// kernel: laughter_lstm_forward.1
$region0: #{laughter_lstm_forward.1}
  #allocation0 [shape = 'u32[]', space=smem, size = 0x4, offset = 0x4, fixed_abs, tag = 'smem constant byte address 0x4 - core index']
  #allocation1 [shape = 'u32[144,128]{1,0:T(1,128)}', space=vmem, size = 0x12000, scoped, tag = 'internal scratch']
  %s0 = inlined_call_operand.vmem [shape: f32[64,16], index: 0, kind: input, shape index: {}]
  %s1 = inlined_call_operand.vmem [shape: f32[16,128], index: 1, kind: input, shape index: {}]
  %s2 = inlined_call_operand.hbm [shape: f32[128,128], index: 2, kind: input, shape index: {}]
  %s3 = inlined_call_operand.vmem [shape: f32[1,128], index: 3, kind: input, shape index: {}]
  %s4 = inlined_call_operand.hbm [shape: f32[128,128], index: 4, kind: input, shape index: {}]
  %s5 = inlined_call_operand.vmem [shape: f32[1,128], index: 5, kind: input, shape index: {}]
  %s6 = inlined_call_operand.vmem [shape: f32[64,128], index: 6, kind: output, shape index: {}]
  %s7 = sld [smem:[#allocation0]]
  $region42: #{laughter_lstm_forward.1} parent=0
    _
  %s9 = ssub.s32 1, %s7
  %s10 = scalar_select 0, %s9, %s7
  $region1: #{laughter_lstm_forward.1} parent=0
    #allocation2 [shape = 'u8[65536]{0}', space=vmem, size = 0x10000, scoped, tag = 'input window, operand 2, single buffered']
    #allocation3 [shape = 's32[1]{0}', space=sflag, size = 0x4, scoped, tag = 'scoped memory for laughter_lstm_forward.1']
    #allocation4 [shape = 'u8[65536]{0}', space=vmem, size = 0x10000, scoped, tag = 'input window, operand 4, single buffered']
    #allocation5 [shape = 's32[1]{0}', space=sflag, size = 0x4, scoped, tag = 'scoped memory for laughter_lstm_forward.1']
    %11 = vsyncpa [#allocation3], 0
    %12 = vsyncpa [#allocation5], 0
    // Predicated region
    $region2: #{laughter_lstm_forward.1} parent=1 // pred_check
      _
    $region3: #{laughter_lstm_forward.1} parent=1 // pred_check_branch
      %14 = sbr.rel (0) target = $region5
    $region4: #{laughter_lstm_forward.1} parent=1 // pred_region
      _
    $region5: #{laughter_lstm_forward.1} parent=1 // pred_fallthru
      _
    // Predicated region
    $region6: #{laughter_lstm_forward.1} parent=1 // pred_check
      _
    $region7: #{laughter_lstm_forward.1} parent=1 // pred_check_branch
      %16 = sbr.rel (0) target = $region9
    $region8: #{laughter_lstm_forward.1} parent=1 // pred_region
      _
    $region9: #{laughter_lstm_forward.1} parent=1 // pred_fallthru
      _
    // Predicated region
    $region10: #{laughter_lstm_forward.1} parent=1 // pred_check
      _
    $region11: #{laughter_lstm_forward.1} parent=1 // pred_check_branch
      %18 = sbr.rel (0) target = $region13
    $region12: #{laughter_lstm_forward.1} parent=1 // pred_region
      %s20 = ssub.s32 2048, 2048
      %21 = vsyncadd [#allocation3], %s20
      %s22 = sshll.u32 [#allocation2], 4
      %s23 = int_to_ptr.vmem [resolvable:$true] %s22
      %28 = dma.hbm_to_vmem [thread:$0]  %s2, 2048, %s23, [#allocation3], 128, 128, 8
    $region13: #{laughter_lstm_forward.1} parent=1 // pred_fallthru
      _
    // Predicated region
    $region14: #{laughter_lstm_forward.1} parent=1 // pred_check
      _
    $region15: #{laughter_lstm_forward.1} parent=1 // pred_check_branch
      %30 = sbr.rel (0) target = $region17
    $region16: #{laughter_lstm_forward.1} parent=1 // pred_region
      _
    $region17: #{laughter_lstm_forward.1} parent=1 // pred_fallthru
      _
    // Predicated region
    $region18: #{laughter_lstm_forward.1} parent=1 // pred_check
      _
    $region19: #{laughter_lstm_forward.1} parent=1 // pred_check_branch
      %32 = sbr.rel (0) target = $region21
    $region20: #{laughter_lstm_forward.1} parent=1 // pred_region
      %s34 = ssub.s32 2048, 2048
      %35 = vsyncadd [#allocation5], %s34
      %s36 = sshll.u32 [#allocation4], 4
      %s37 = int_to_ptr.vmem [resolvable:$true] %s36
      %42 = dma.hbm_to_vmem [thread:$0]  %s4, 2048, %s37, [#allocation5], 128, 128, 8
    $region21: #{laughter_lstm_forward.1} parent=1 // pred_fallthru
      _
    // Predicated region
    $region22: #{laughter_lstm_forward.1} parent=1 // pred_check
      _
    $region23: #{laughter_lstm_forward.1} parent=1 // pred_check_branch
      %44 = sbr.rel (0) target = $region25
    $region24: #{laughter_lstm_forward.1} parent=1 // pred_region
      _
    $region25: #{laughter_lstm_forward.1} parent=1 // pred_fallthru
      _
    // Predicated region
    $region26: #{laughter_lstm_forward.1} parent=1 // pred_check
      _
    $region27: #{laughter_lstm_forward.1} parent=1 // pred_check_branch
      %46 = sbr.rel (0) target = $region29
    $region28: #{laughter_lstm_forward.1} parent=1 // pred_region
      %47 = dma.done [#allocation3], 2048
    $region29: #{laughter_lstm_forward.1} parent=1 // pred_fallthru
      _
    // Predicated region
    $region30: #{laughter_lstm_forward.1} parent=1 // pred_check
      _
    $region31: #{laughter_lstm_forward.1} parent=1 // pred_check_branch
      %49 = sbr.rel (0) target = $region33
    $region32: #{laughter_lstm_forward.1} parent=1 // pred_region
      %50 = dma.done [#allocation5], 2048
    $region33: #{laughter_lstm_forward.1} parent=1 // pred_fallthru
      _
    %v51 = vld [vmem:[%s0] sm:$0xff]
    %v52 = vld [vmem:[%s0 + $0x8] sm:$0xff]
    %v53 = vld [vmem:[%s0 + $0x10] sm:$0xff]
    %v54 = vld [vmem:[%s0 + $0x18] sm:$0xff]
    %v55 = vld [vmem:[%s0 + $0x20] sm:$0xff]
    %v56 = vld [vmem:[%s0 + $0x28] sm:$0xff]
    %v57 = vld [vmem:[%s0 + $0x30] sm:$0xff]
    %v58 = vld [vmem:[%s0 + $0x38] sm:$0xff]
    %v59 = vld [vmem:[%s1] sm:$0xff]
    %v60 = vld [vmem:[%s1 + $0x8] sm:$0xff]
    %v61 = vld [vmem:[%s3] sm:$0x1]
    %v63 = vlaneseq
    %v64 = vshrl.u32 %v63, 7
    %v65 = vsub.s32 0, %v64
    %v66 = vrot.slane %v61, %v65
    %vm68 = vcmask 130048
    %v70 = vsel %vm68, %v51, 0
    %v73 = vsel %vm68, %v52, 0
    %v76 = vsel %vm68, %v53, 0
    %v79 = vsel %vm68, %v54, 0
    %v82 = vsel %vm68, %v55, 0
    %v85 = vsel %vm68, %v56, 0
    %v88 = vsel %vm68, %v57, 0
    %v91 = vsel %vm68, %v58, 0
    %93 = vmatprep.subr.mxu0 0.0
    %94 = vmatpush1.msra.mxu0 0.0
    %95 = vmatprep.subr.mxu0 0.0
    %96 = vmatpush1.msra.mxu0 0.0
    %97 = vmatprep.subr.mxu0 0.0
    %98 = vmatpush1.msra.mxu0 0.0
    %99 = vmatprep.subr.mxu0 0.0
    %100 = vmatpush1.msra.mxu0 0.0
    %101 = vmatprep.subr.mxu0 0.0
    %102 = vmatpush1.msra.mxu0 0.0
    %103 = vmatprep.subr.mxu0 0.0
    %104 = vmatpush1.msra.mxu0 0.0
    %105 = vmatprep.subr.mxu0 0.0
    %106 = vmatpush1.msra.mxu0 0.0
    %107 = vmatprep.subr.mxu0 0.0
    %108 = vmatpush1.msra.mxu0 0.0
    %109 = vmatprep.subr.mxu0 0.0
    %110 = vmatpush1.msra.mxu0 0.0
    %111 = vmatprep.subr.mxu0 0.0
    %112 = vmatpush1.msra.mxu0 0.0
    %113 = vmatprep.subr.mxu0 0.0
    %114 = vmatpush1.msra.mxu0 0.0
    %115 = vmatprep.subr.mxu0 0.0
    %116 = vmatpush1.msra.mxu0 0.0
    %117 = vmatprep.subr.mxu0 0.0
    %118 = vmatpush1.msra.mxu0 0.0
    %119 = vmatprep.subr.mxu0 0.0
    %120 = vmatpush1.msra.mxu0 0.0
    %121 = vmatprep.subr.mxu0 0.0
    %122 = vmatpush1.msra.mxu0 %v60
    %123 = vmatprep.subr.mxu0 0.0
    %124 = vmatpush1.msra.mxu0 %v59
    %125 = vmatprep.subr.mxu0 0.0
    %126 = vmatpush2.msra.mxu0 0.0
    %127 = vmatprep.subr.mxu0 0.0
    %128 = vmatpush2.msra.mxu0 0.0
    %129 = vmatprep.subr.mxu0 0.0
    %130 = vmatpush2.msra.mxu0 0.0
    %131 = vmatprep.subr.mxu0 0.0
    %132 = vmatpush2.msra.mxu0 0.0
    %133 = vmatprep.subr.mxu0 0.0
    %134 = vmatpush2.msra.mxu0 0.0
    %135 = vmatprep.subr.mxu0 0.0
    %136 = vmatpush2.msra.mxu0 0.0
    %137 = vmatprep.subr.mxu0 0.0
    %138 = vmatpush2.msra.mxu0 0.0
    %139 = vmatprep.subr.mxu0 0.0
    %140 = vmatpush2.msra.mxu0 0.0
    %141 = vmatprep.subr.mxu0 0.0
    %142 = vmatpush2.msra.mxu0 0.0
    %143 = vmatprep.subr.mxu0 0.0
    %144 = vmatpush2.msra.mxu0 0.0
    %145 = vmatprep.subr.mxu0 0.0
    %146 = vmatpush2.msra.mxu0 0.0
    %147 = vmatprep.subr.mxu0 0.0
    %148 = vmatpush2.msra.mxu0 0.0
    %149 = vmatprep.subr.mxu0 0.0
    %150 = vmatpush2.msra.mxu0 0.0
    %151 = vmatprep.subr.mxu0 0.0
    %152 = vmatpush2.msra.mxu0 0.0
    %153 = vmatprep.subr.mxu0 0.0
    %154 = vmatpush2.msra.mxu0 0.0
    %155 = vmatprep.subr.mxu0 0.0
    %156 = vmatpush2.msra.mxu0 0.0
    %157 = vmatprep.mubr.f32.mxu0 0.0
    %158 = vmatmul.mubr.f32.gmra.mxu0 %v70
    %v159 = vpop.f32.mrf.mxu0
    %v160 = vadd.f32 %v66, %v159
    %v161 = vpop.f32.mrf.mxu0
    %162 = vmatprep.mubr.f32.mxu0 0.0
    %163 = vmatmul.mubr.f32.gmra.mxu0 %v73
    %v164 = vpop.f32.mrf.mxu0
    %v165 = vadd.f32 %v66, %v164
    %v166 = vpop.f32.mrf.mxu0
    %167 = vmatprep.mubr.f32.mxu0 0.0
    %168 = vmatmul.mubr.f32.gmra.mxu0 %v76
    %v169 = vpop.f32.mrf.mxu0
    %v170 = vadd.f32 %v66, %v169
    %v171 = vpop.f32.mrf.mxu0
    %172 = vmatprep.mubr.f32.mxu0 0.0
    %173 = vmatmul.mubr.f32.gmra.mxu0 %v79
    %v174 = vpop.f32.mrf.mxu0
    %v175 = vadd.f32 %v66, %v174
    %v176 = vpop.f32.mrf.mxu0
    %177 = vmatprep.mubr.f32.mxu0 0.0
    %178 = vmatmul.mubr.f32.gmra.mxu0 %v82
    %v179 = vpop.f32.mrf.mxu0
    %v180 = vadd.f32 %v66, %v179
    %v181 = vpop.f32.mrf.mxu0
    %182 = vmatprep.mubr.f32.mxu0 0.0
    %183 = vmatmul.mubr.f32.gmra.mxu0 %v85
    %v184 = vpop.f32.mrf.mxu0
    %v185 = vadd.f32 %v66, %v184
    %v186 = vpop.f32.mrf.mxu0
    %187 = vmatprep.mubr.f32.mxu0 0.0
    %188 = vmatmul.mubr.f32.gmra.mxu0 %v88
    %v189 = vpop.f32.mrf.mxu0
    %v190 = vadd.f32 %v66, %v189
    %v191 = vpop.f32.mrf.mxu0
    %192 = vmatprep.mubr.f32.mxu0 0.0
    %193 = vmatmul.mubr.f32.gmra.mxu0 %v91
    %v194 = vpop.f32.mrf.mxu0
    %v195 = vadd.f32 %v66, %v194
    %v196 = vpop.f32.mrf.mxu0
    %197 = vdwg.mxu0
    %v198 = vld [vmem:[#allocation2] sm:$0xff]
    %v199 = vld [vmem:[#allocation2 + $0x8] sm:$0xff]
    %v200 = vld [vmem:[#allocation2 + $0x10] sm:$0xff]
    %v201 = vld [vmem:[#allocation2 + $0x18] sm:$0xff]
    %v202 = vld [vmem:[#allocation2 + $0x20] sm:$0xff]
    %v203 = vld [vmem:[#allocation2 + $0x28] sm:$0xff]
    %v204 = vld [vmem:[#allocation2 + $0x30] sm:$0xff]
    %v205 = vld [vmem:[#allocation2 + $0x38] sm:$0xff]
    %v206 = vld [vmem:[#allocation2 + $0x40] sm:$0xff]
    %v207 = vld [vmem:[#allocation2 + $0x48] sm:$0xff]
    %v208 = vld [vmem:[#allocation2 + $0x50] sm:$0xff]
    %v209 = vld [vmem:[#allocation2 + $0x58] sm:$0xff]
    %v210 = vld [vmem:[#allocation2 + $0x60] sm:$0xff]
    %v211 = vld [vmem:[#allocation2 + $0x68] sm:$0xff]
    %v212 = vld [vmem:[#allocation2 + $0x70] sm:$0xff]
    %v213 = vld [vmem:[#allocation2 + $0x78] sm:$0xff]
    %v214 = vlaneseq
    %v215 = vand.u32 %v214, 127
    %vm216 = vcmp.lt.s32.totalorder %v215, 96
    %v217 = vsel %vm216, 0.5, 1.0
    %v218 = vsel %vm216, 0.5, 0.0
    %219 = vmatprep.subr.mxu0 0.0
    %220 = vmatpush1.msra.mxu0 %v213
    %221 = vmatprep.subr.mxu0 0.0
    %222 = vmatpush1.msra.mxu0 %v212
    %223 = vmatprep.subr.mxu0 0.0
    %224 = vmatpush1.msra.mxu0 %v211
    %225 = vmatprep.subr.mxu0 0.0
    %226 = vmatpush1.msra.mxu0 %v210
    %227 = vmatprep.subr.mxu0 0.0
    %228 = vmatpush1.msra.mxu0 %v209
    %229 = vmatprep.subr.mxu0 0.0
    %230 = vmatpush1.msra.mxu0 %v208
    %231 = vmatprep.subr.mxu0 0.0
    %232 = vmatpush1.msra.mxu0 %v207
    %233 = vmatprep.subr.mxu0 0.0
    %234 = vmatpush1.msra.mxu0 %v206
    %235 = vmatprep.subr.mxu0 0.0
    %236 = vmatpush1.msra.mxu0 %v205
    %237 = vmatprep.subr.mxu0 0.0
    %238 = vmatpush1.msra.mxu0 %v204
    %239 = vmatprep.subr.mxu0 0.0
    %240 = vmatpush1.msra.mxu0 %v203
    %241 = vmatprep.subr.mxu0 0.0
    %242 = vmatpush1.msra.mxu0 %v202
    %243 = vmatprep.subr.mxu0 0.0
    %244 = vmatpush1.msra.mxu0 %v201
    %245 = vmatprep.subr.mxu0 0.0
    %246 = vmatpush1.msra.mxu0 %v200
    %247 = vmatprep.subr.mxu0 0.0
    %248 = vmatpush1.msra.mxu0 %v199
    %249 = vmatprep.subr.mxu0 0.0
    %250 = vmatpush1.msra.mxu0 %v198
    %251 = vmatprep.subr.mxu0 0.0
    %252 = vmatpush2.msra.mxu0 0.0
    %253 = vmatprep.subr.mxu0 0.0
    %254 = vmatpush2.msra.mxu0 0.0
    %255 = vmatprep.subr.mxu0 0.0
    %256 = vmatpush2.msra.mxu0 0.0
    %257 = vmatprep.subr.mxu0 0.0
    %258 = vmatpush2.msra.mxu0 0.0
    %259 = vmatprep.subr.mxu0 0.0
    %260 = vmatpush2.msra.mxu0 0.0
    %261 = vmatprep.subr.mxu0 0.0
    %262 = vmatpush2.msra.mxu0 0.0
    %263 = vmatprep.subr.mxu0 0.0
    %264 = vmatpush2.msra.mxu0 0.0
    %265 = vmatprep.subr.mxu0 0.0
    %266 = vmatpush2.msra.mxu0 0.0
    %267 = vmatprep.subr.mxu0 0.0
    %268 = vmatpush2.msra.mxu0 0.0
    %269 = vmatprep.subr.mxu0 0.0
    %270 = vmatpush2.msra.mxu0 0.0
    %271 = vmatprep.subr.mxu0 0.0
    %272 = vmatpush2.msra.mxu0 0.0
    %273 = vmatprep.subr.mxu0 0.0
    %274 = vmatpush2.msra.mxu0 0.0
    %275 = vmatprep.subr.mxu0 0.0
    %276 = vmatpush2.msra.mxu0 0.0
    %277 = vmatprep.subr.mxu0 0.0
    %278 = vmatpush2.msra.mxu0 0.0
    %279 = vmatprep.subr.mxu0 0.0
    %280 = vmatpush2.msra.mxu0 0.0
    %281 = vmatprep.subr.mxu0 0.0
    %282 = vmatpush2.msra.mxu0 0.0
    %283 = vmatprep.mubr.f32.mxu0 0.0
    %284 = vmatmul.mubr.f32.gmra.mxu0 0.0
    %v285 = vpop.f32.mrf.mxu0
    %v286 = vadd.f32 0.0, %v285
    %v287 = vpop.f32.mrf.mxu0
    %288 = vdwg.mxu0
    %v289 = vadd.f32 %v160, %v286
    %v290 = vtanh.pop %v289
    %v291 = vmul.f32 %v290, %v217
    %v292 = vadd.f32 %v291, %v218
    %293 = vrot.lane.b32.xlu0 %v292, 96
    %v294 = vpop.permute.xlu0 %293
    %295 = vrot.lane.b32.xlu0 %v292, 32
    %v296 = vpop.permute.xlu0 %295
    %297 = vrot.lane.b32.xlu0 %v292, 64
    %v298 = vpop.permute.xlu0 %297
    %v299 = vmul.f32 %v294, 0.0
    %v300 = vmul.f32 %v292, %v296
    %v301 = vadd.f32 %v299, %v300
    %v302 = vtanh.pop %v301
    %v303 = vmul.f32 %v298, %v302
    %304 = vmatprep.subr.mxu0 0.0
    %305 = vmatpush1.msra.mxu0 %v213
    %306 = vmatprep.subr.mxu0 0.0
    %307 = vmatpush1.msra.mxu0 %v212
    %308 = vmatprep.subr.mxu0 0.0
    %309 = vmatpush1.msra.mxu0 %v211
    %310 = vmatprep.subr.mxu0 0.0
    %311 = vmatpush1.msra.mxu0 %v210
    %312 = vmatprep.subr.mxu0 0.0
    %313 = vmatpush1.msra.mxu0 %v209
    %314 = vmatprep.subr.mxu0 0.0
    %315 = vmatpush1.msra.mxu0 %v208
    %316 = vmatprep.subr.mxu0 0.0
    %317 = vmatpush1.msra.mxu0 %v207
    %318 = vmatprep.subr.mxu0 0.0
    %319 = vmatpush1.msra.mxu0 %v206
    %320 = vmatprep.subr.mxu0 0.0
    %321 = vmatpush1.msra.mxu0 %v205
    %322 = vmatprep.subr.mxu0 0.0
    %323 = vmatpush1.msra.mxu0 %v204
    %324 = vmatprep.subr.mxu0 0.0
    %325 = vmatpush1.msra.mxu0 %v203
    %326 = vmatprep.subr.mxu0 0.0
    %327 = vmatpush1.msra.mxu0 %v202
    %328 = vmatprep.subr.mxu0 0.0
    %329 = vmatpush1.msra.mxu0 %v201
    %330 = vmatprep.subr.mxu0 0.0
    %331 = vmatpush1.msra.mxu0 %v200
    %332 = vmatprep.subr.mxu0 0.0
    %333 = vmatpush1.msra.mxu0 %v199
    %334 = vmatprep.subr.mxu0 0.0
    %335 = vmatpush1.msra.mxu0 %v198
    %336 = vmatprep.subr.mxu0 0.0
    %337 = vmatpush2.msra.mxu0 0.0
    %338 = vmatprep.subr.mxu0 0.0
    %339 = vmatpush2.msra.mxu0 0.0
    %340 = vmatprep.subr.mxu0 0.0
    %341 = vmatpush2.msra.mxu0 0.0
    %342 = vmatprep.subr.mxu0 0.0
    %343 = vmatpush2.msra.mxu0 0.0
    %344 = vmatprep.subr.mxu0 0.0
    %345 = vmatpush2.msra.mxu0 0.0
    %346 = vmatprep.subr.mxu0 0.0
    %347 = vmatpush2.msra.mxu0 0.0
    %348 = vmatprep.subr.mxu0 0.0
    %349 = vmatpush2.msra.mxu0 0.0
    %350 = vmatprep.subr.mxu0 0.0
    %351 = vmatpush2.msra.mxu0 0.0
    %352 = vmatprep.subr.mxu0 0.0
    %353 = vmatpush2.msra.mxu0 0.0
    %354 = vmatprep.subr.mxu0 0.0
    %355 = vmatpush2.msra.mxu0 0.0
    %356 = vmatprep.subr.mxu0 0.0
    %357 = vmatpush2.msra.mxu0 0.0
    %358 = vmatprep.subr.mxu0 0.0
    %359 = vmatpush2.msra.mxu0 0.0
    %360 = vmatprep.subr.mxu0 0.0
    %361 = vmatpush2.msra.mxu0 0.0
    %362 = vmatprep.subr.mxu0 0.0
    %363 = vmatpush2.msra.mxu0 0.0
    %364 = vmatprep.subr.mxu0 0.0
    %365 = vmatpush2.msra.mxu0 0.0
    %366 = vmatprep.subr.mxu0 0.0
    %367 = vmatpush2.msra.mxu0 0.0
    %368 = vmatprep.mubr.f32.mxu0 0.0
    %369 = vmatmul.mubr.f32.gmra.mxu0 %v303
    %v370 = vpop.f32.mrf.mxu0
    %v371 = vadd.f32 0.0, %v370
    %v372 = vpop.f32.mrf.mxu0
    %373 = vdwg.mxu0
    %v374 = vadd.f32 %v165, %v371
    %v375 = vtanh.pop %v374
    %v376 = vmul.f32 %v375, %v217
    %v377 = vadd.f32 %v376, %v218
    %378 = vrot.lane.b32.xlu0 %v377, 96
    %v379 = vpop.permute.xlu0 %378
    %380 = vrot.lane.b32.xlu0 %v377, 32
    %v381 = vpop.permute.xlu0 %380
    %382 = vrot.lane.b32.xlu0 %v377, 64
    %v383 = vpop.permute.xlu0 %382
    %v384 = vmul.f32 %v379, %v301
    %v385 = vmul.f32 %v377, %v381
    %v386 = vadd.f32 %v384, %v385
    %v387 = vtanh.pop %v386
    %v388 = vmul.f32 %v383, %v387
    %389 = vmatprep.subr.mxu0 0.0
    %390 = vmatpush1.msra.mxu0 %v213
    %391 = vmatprep.subr.mxu0 0.0
    %392 = vmatpush1.msra.mxu0 %v212
    %393 = vmatprep.subr.mxu0 0.0
    %394 = vmatpush1.msra.mxu0 %v211
    %395 = vmatprep.subr.mxu0 0.0
    %396 = vmatpush1.msra.mxu0 %v210
    %397 = vmatprep.subr.mxu0 0.0
    %398 = vmatpush1.msra.mxu0 %v209
    %399 = vmatprep.subr.mxu0 0.0
    %400 = vmatpush1.msra.mxu0 %v208
    %401 = vmatprep.subr.mxu0 0.0
    %402 = vmatpush1.msra.mxu0 %v207
    %403 = vmatprep.subr.mxu0 0.0
    %404 = vmatpush1.msra.mxu0 %v206
    %405 = vmatprep.subr.mxu0 0.0
    %406 = vmatpush1.msra.mxu0 %v205
    %407 = vmatprep.subr.mxu0 0.0
    %408 = vmatpush1.msra.mxu0 %v204
    %409 = vmatprep.subr.mxu0 0.0
    %410 = vmatpush1.msra.mxu0 %v203
    %411 = vmatprep.subr.mxu0 0.0
    %412 = vmatpush1.msra.mxu0 %v202
    %413 = vmatprep.subr.mxu0 0.0
    %414 = vmatpush1.msra.mxu0 %v201
    %415 = vmatprep.subr.mxu0 0.0
    %416 = vmatpush1.msra.mxu0 %v200
    %417 = vmatprep.subr.mxu0 0.0
    %418 = vmatpush1.msra.mxu0 %v199
    %419 = vmatprep.subr.mxu0 0.0
    %420 = vmatpush1.msra.mxu0 %v198
    %421 = vmatprep.subr.mxu0 0.0
    %422 = vmatpush2.msra.mxu0 0.0
    %423 = vmatprep.subr.mxu0 0.0
    %424 = vmatpush2.msra.mxu0 0.0
    %425 = vmatprep.subr.mxu0 0.0
    %426 = vmatpush2.msra.mxu0 0.0
    %427 = vmatprep.subr.mxu0 0.0
    %428 = vmatpush2.msra.mxu0 0.0
    %429 = vmatprep.subr.mxu0 0.0
    %430 = vmatpush2.msra.mxu0 0.0
    %431 = vmatprep.subr.mxu0 0.0
    %432 = vmatpush2.msra.mxu0 0.0
    %433 = vmatprep.subr.mxu0 0.0
    %434 = vmatpush2.msra.mxu0 0.0
    %435 = vmatprep.subr.mxu0 0.0
    %436 = vmatpush2.msra.mxu0 0.0
    %437 = vmatprep.subr.mxu0 0.0
    %438 = vmatpush2.msra.mxu0 0.0
    %439 = vmatprep.subr.mxu0 0.0
    %440 = vmatpush2.msra.mxu0 0.0
    %441 = vmatprep.subr.mxu0 0.0
    %442 = vmatpush2.msra.mxu0 0.0
    %443 = vmatprep.subr.mxu0 0.0
    %444 = vmatpush2.msra.mxu0 0.0
    %445 = vmatprep.subr.mxu0 0.0
    %446 = vmatpush2.msra.mxu0 0.0
    %447 = vmatprep.subr.mxu0 0.0
    %448 = vmatpush2.msra.mxu0 0.0
    %449 = vmatprep.subr.mxu0 0.0
    %450 = vmatpush2.msra.mxu0 0.0
    %451 = vmatprep.subr.mxu0 0.0
    %452 = vmatpush2.msra.mxu0 0.0
    %453 = vmatprep.mubr.f32.mxu0 0.0
    %454 = vmatmul.mubr.f32.gmra.mxu0 %v388
    %v455 = vpop.f32.mrf.mxu0
    %v456 = vadd.f32 0.0, %v455
    %v457 = vpop.f32.mrf.mxu0
    %458 = vdwg.mxu0
    %v459 = vadd.f32 %v170, %v456
    %v460 = vtanh.pop %v459
    %v461 = vmul.f32 %v460, %v217
    %v462 = vadd.f32 %v461, %v218
    %463 = vrot.lane.b32.xlu0 %v462, 96
    %v464 = vpop.permute.xlu0 %463
    %465 = vrot.lane.b32.xlu0 %v462, 32
    %v466 = vpop.permute.xlu0 %465
    %467 = vrot.lane.b32.xlu0 %v462, 64
    %v468 = vpop.permute.xlu0 %467
    %v469 = vmul.f32 %v464, %v386
    %v470 = vmul.f32 %v462, %v466
    %v471 = vadd.f32 %v469, %v470
    %v472 = vtanh.pop %v471
    %v473 = vmul.f32 %v468, %v472
    %474 = vmatprep.subr.mxu0 0.0
    %475 = vmatpush1.msra.mxu0 %v213
    %476 = vmatprep.subr.mxu0 0.0
    %477 = vmatpush1.msra.mxu0 %v212
    %478 = vmatprep.subr.mxu0 0.0
    %479 = vmatpush1.msra.mxu0 %v211
    %480 = vmatprep.subr.mxu0 0.0
    %481 = vmatpush1.msra.mxu0 %v210
    %482 = vmatprep.subr.mxu0 0.0
    %483 = vmatpush1.msra.mxu0 %v209
    %484 = vmatprep.subr.mxu0 0.0
    %485 = vmatpush1.msra.mxu0 %v208
    %486 = vmatprep.subr.mxu0 0.0
    %487 = vmatpush1.msra.mxu0 %v207
    %488 = vmatprep.subr.mxu0 0.0
    %489 = vmatpush1.msra.mxu0 %v206
    %490 = vmatprep.subr.mxu0 0.0
    %491 = vmatpush1.msra.mxu0 %v205
    %492 = vmatprep.subr.mxu0 0.0
    %493 = vmatpush1.msra.mxu0 %v204
    %494 = vmatprep.subr.mxu0 0.0
    %495 = vmatpush1.msra.mxu0 %v203
    %496 = vmatprep.subr.mxu0 0.0
    %497 = vmatpush1.msra.mxu0 %v202
    %498 = vmatprep.subr.mxu0 0.0
    %499 = vmatpush1.msra.mxu0 %v201
    %500 = vmatprep.subr.mxu0 0.0
    %501 = vmatpush1.msra.mxu0 %v200
    %502 = vmatprep.subr.mxu0 0.0
    %503 = vmatpush1.msra.mxu0 %v199
    %504 = vmatprep.subr.mxu0 0.0
    %505 = vmatpush1.msra.mxu0 %v198
    %506 = vmatprep.subr.mxu0 0.0
    %507 = vmatpush2.msra.mxu0 0.0
    %508 = vmatprep.subr.mxu0 0.0
    %509 = vmatpush2.msra.mxu0 0.0
    %510 = vmatprep.subr.mxu0 0.0
    %511 = vmatpush2.msra.mxu0 0.0
    %512 = vmatprep.subr.mxu0 0.0
    %513 = vmatpush2.msra.mxu0 0.0
    %514 = vmatprep.subr.mxu0 0.0
    %515 = vmatpush2.msra.mxu0 0.0
    %516 = vmatprep.subr.mxu0 0.0
    %517 = vmatpush2.msra.mxu0 0.0
    %518 = vmatprep.subr.mxu0 0.0
    %519 = vmatpush2.msra.mxu0 0.0
    %520 = vmatprep.subr.mxu0 0.0
    %521 = vmatpush2.msra.mxu0 0.0
    %522 = vmatprep.subr.mxu0 0.0
    %523 = vmatpush2.msra.mxu0 0.0
    %524 = vmatprep.subr.mxu0 0.0
    %525 = vmatpush2.msra.mxu0 0.0
    %526 = vmatprep.subr.mxu0 0.0
    %527 = vmatpush2.msra.mxu0 0.0
    %528 = vmatprep.subr.mxu0 0.0
    %529 = vmatpush2.msra.mxu0 0.0
    %530 = vmatprep.subr.mxu0 0.0
    %531 = vmatpush2.msra.mxu0 0.0
    %532 = vmatprep.subr.mxu0 0.0
    %533 = vmatpush2.msra.mxu0 0.0
    %534 = vmatprep.subr.mxu0 0.0
    %535 = vmatpush2.msra.mxu0 0.0
    %536 = vmatprep.subr.mxu0 0.0
    %537 = vmatpush2.msra.mxu0 0.0
    %538 = vmatprep.mubr.f32.mxu0 0.0
    %539 = vmatmul.mubr.f32.gmra.mxu0 %v473
    %v540 = vpop.f32.mrf.mxu0
    %v541 = vadd.f32 0.0, %v540
    %v542 = vpop.f32.mrf.mxu0
    %543 = vdwg.mxu0
    %v544 = vadd.f32 %v175, %v541
    %v545 = vtanh.pop %v544
    %v546 = vmul.f32 %v545, %v217
    %v547 = vadd.f32 %v546, %v218
    %548 = vrot.lane.b32.xlu0 %v547, 96
    %v549 = vpop.permute.xlu0 %548
    %550 = vrot.lane.b32.xlu0 %v547, 32
    %v551 = vpop.permute.xlu0 %550
    %552 = vrot.lane.b32.xlu0 %v547, 64
    %v553 = vpop.permute.xlu0 %552
    %v554 = vmul.f32 %v549, %v471
    %v555 = vmul.f32 %v547, %v551
    %v556 = vadd.f32 %v554, %v555
    %v557 = vtanh.pop %v556
    %v558 = vmul.f32 %v553, %v557
    %559 = vmatprep.subr.mxu0 0.0
    %560 = vmatpush1.msra.mxu0 %v213
    %561 = vmatprep.subr.mxu0 0.0
    %562 = vmatpush1.msra.mxu0 %v212
    %563 = vmatprep.subr.mxu0 0.0
    %564 = vmatpush1.msra.mxu0 %v211
    %565 = vmatprep.subr.mxu0 0.0
    %566 = vmatpush1.msra.mxu0 %v210
    %567 = vmatprep.subr.mxu0 0.0
    %568 = vmatpush1.msra.mxu0 %v209
    %569 = vmatprep.subr.mxu0 0.0
    %570 = vmatpush1.msra.mxu0 %v208
    %571 = vmatprep.subr.mxu0 0.0
    %572 = vmatpush1.msra.mxu0 %v207
    %573 = vmatprep.subr.mxu0 0.0
    %574 = vmatpush1.msra.mxu0 %v206
    %575 = vmatprep.subr.mxu0 0.0
    %576 = vmatpush1.msra.mxu0 %v205
    %577 = vmatprep.subr.mxu0 0.0
    %578 = vmatpush1.msra.mxu0 %v204
    %579 = vmatprep.subr.mxu0 0.0
    %580 = vmatpush1.msra.mxu0 %v203
    %581 = vmatprep.subr.mxu0 0.0
    %582 = vmatpush1.msra.mxu0 %v202
    %583 = vmatprep.subr.mxu0 0.0
    %584 = vmatpush1.msra.mxu0 %v201
    %585 = vmatprep.subr.mxu0 0.0
    %586 = vmatpush1.msra.mxu0 %v200
    %587 = vmatprep.subr.mxu0 0.0
    %588 = vmatpush1.msra.mxu0 %v199
    %589 = vmatprep.subr.mxu0 0.0
    %590 = vmatpush1.msra.mxu0 %v198
    %591 = vmatprep.subr.mxu0 0.0
    %592 = vmatpush2.msra.mxu0 0.0
    %593 = vmatprep.subr.mxu0 0.0
    %594 = vmatpush2.msra.mxu0 0.0
    %595 = vmatprep.subr.mxu0 0.0
    %596 = vmatpush2.msra.mxu0 0.0
    %597 = vmatprep.subr.mxu0 0.0
    %598 = vmatpush2.msra.mxu0 0.0
    %599 = vmatprep.subr.mxu0 0.0
    %600 = vmatpush2.msra.mxu0 0.0
    %601 = vmatprep.subr.mxu0 0.0
    %602 = vmatpush2.msra.mxu0 0.0
    %603 = vmatprep.subr.mxu0 0.0
    %604 = vmatpush2.msra.mxu0 0.0
    %605 = vmatprep.subr.mxu0 0.0
    %606 = vmatpush2.msra.mxu0 0.0
    %607 = vmatprep.subr.mxu0 0.0
    %608 = vmatpush2.msra.mxu0 0.0
    %609 = vmatprep.subr.mxu0 0.0
    %610 = vmatpush2.msra.mxu0 0.0
    %611 = vmatprep.subr.mxu0 0.0
    %612 = vmatpush2.msra.mxu0 0.0
    %613 = vmatprep.subr.mxu0 0.0
    %614 = vmatpush2.msra.mxu0 0.0
    %615 = vmatprep.subr.mxu0 0.0
    %616 = vmatpush2.msra.mxu0 0.0
    %617 = vmatprep.subr.mxu0 0.0
    %618 = vmatpush2.msra.mxu0 0.0
    %619 = vmatprep.subr.mxu0 0.0
    %620 = vmatpush2.msra.mxu0 0.0
    %621 = vmatprep.subr.mxu0 0.0
    %622 = vmatpush2.msra.mxu0 0.0
    %623 = vmatprep.mubr.f32.mxu0 0.0
    %624 = vmatmul.mubr.f32.gmra.mxu0 %v558
    %v625 = vpop.f32.mrf.mxu0
    %v626 = vadd.f32 0.0, %v625
    %v627 = vpop.f32.mrf.mxu0
    %628 = vdwg.mxu0
    %v629 = vadd.f32 %v180, %v626
    %v630 = vtanh.pop %v629
    %v631 = vmul.f32 %v630, %v217
    %v632 = vadd.f32 %v631, %v218
    %633 = vrot.lane.b32.xlu0 %v632, 96
    %v634 = vpop.permute.xlu0 %633
    %635 = vrot.lane.b32.xlu0 %v632, 32
    %v636 = vpop.permute.xlu0 %635
    %637 = vrot.lane.b32.xlu0 %v632, 64
    %v638 = vpop.permute.xlu0 %637
    %v639 = vmul.f32 %v634, %v556
    %v640 = vmul.f32 %v632, %v636
    %v641 = vadd.f32 %v639, %v640
    %v642 = vtanh.pop %v641
    %v643 = vmul.f32 %v638, %v642
    %644 = vmatprep.subr.mxu0 0.0
    %645 = vmatpush1.msra.mxu0 %v213
    %646 = vmatprep.subr.mxu0 0.0
    %647 = vmatpush1.msra.mxu0 %v212
    %648 = vmatprep.subr.mxu0 0.0
    %649 = vmatpush1.msra.mxu0 %v211
    %650 = vmatprep.subr.mxu0 0.0
    %651 = vmatpush1.msra.mxu0 %v210
    %652 = vmatprep.subr.mxu0 0.0
    %653 = vmatpush1.msra.mxu0 %v209
    %654 = vmatprep.subr.mxu0 0.0
    %655 = vmatpush1.msra.mxu0 %v208
    %656 = vmatprep.subr.mxu0 0.0
    %657 = vmatpush1.msra.mxu0 %v207
    %658 = vmatprep.subr.mxu0 0.0
    %659 = vmatpush1.msra.mxu0 %v206
    %660 = vmatprep.subr.mxu0 0.0
    %661 = vmatpush1.msra.mxu0 %v205
    %662 = vmatprep.subr.mxu0 0.0
    %663 = vmatpush1.msra.mxu0 %v204
    %664 = vmatprep.subr.mxu0 0.0
    %665 = vmatpush1.msra.mxu0 %v203
    %666 = vmatprep.subr.mxu0 0.0
    %667 = vmatpush1.msra.mxu0 %v202
    %668 = vmatprep.subr.mxu0 0.0
    %669 = vmatpush1.msra.mxu0 %v201
    %670 = vmatprep.subr.mxu0 0.0
    %671 = vmatpush1.msra.mxu0 %v200
    %672 = vmatprep.subr.mxu0 0.0
    %673 = vmatpush1.msra.mxu0 %v199
    %674 = vmatprep.subr.mxu0 0.0
    %675 = vmatpush1.msra.mxu0 %v198
    %676 = vmatprep.subr.mxu0 0.0
    %677 = vmatpush2.msra.mxu0 0.0
    %678 = vmatprep.subr.mxu0 0.0
    %679 = vmatpush2.msra.mxu0 0.0
    %680 = vmatprep.subr.mxu0 0.0
    %681 = vmatpush2.msra.mxu0 0.0
    %682 = vmatprep.subr.mxu0 0.0
    %683 = vmatpush2.msra.mxu0 0.0
    %684 = vmatprep.subr.mxu0 0.0
    %685 = vmatpush2.msra.mxu0 0.0
    %686 = vmatprep.subr.mxu0 0.0
    %687 = vmatpush2.msra.mxu0 0.0
    %688 = vmatprep.subr.mxu0 0.0
    %689 = vmatpush2.msra.mxu0 0.0
    %690 = vmatprep.subr.mxu0 0.0
    %691 = vmatpush2.msra.mxu0 0.0
    %692 = vmatprep.subr.mxu0 0.0
    %693 = vmatpush2.msra.mxu0 0.0
    %694 = vmatprep.subr.mxu0 0.0
    %695 = vmatpush2.msra.mxu0 0.0
    %696 = vmatprep.subr.mxu0 0.0
    %697 = vmatpush2.msra.mxu0 0.0
    %698 = vmatprep.subr.mxu0 0.0
    %699 = vmatpush2.msra.mxu0 0.0
    %700 = vmatprep.subr.mxu0 0.0
    %701 = vmatpush2.msra.mxu0 0.0
    %702 = vmatprep.subr.mxu0 0.0
    %703 = vmatpush2.msra.mxu0 0.0
    %704 = vmatprep.subr.mxu0 0.0
    %705 = vmatpush2.msra.mxu0 0.0
    %706 = vmatprep.subr.mxu0 0.0
    %707 = vmatpush2.msra.mxu0 0.0
    %708 = vmatprep.mubr.f32.mxu0 0.0
    %709 = vmatmul.mubr.f32.gmra.mxu0 %v643
    %v710 = vpop.f32.mrf.mxu0
    %v711 = vadd.f32 0.0, %v710
    %v712 = vpop.f32.mrf.mxu0
    %713 = vdwg.mxu0
    %v714 = vadd.f32 %v185, %v711
    %v715 = vtanh.pop %v714
    %v716 = vmul.f32 %v715, %v217
    %v717 = vadd.f32 %v716, %v218
    %718 = vrot.lane.b32.xlu0 %v717, 96
    %v719 = vpop.permute.xlu0 %718
    %720 = vrot.lane.b32.xlu0 %v717, 32
    %v721 = vpop.permute.xlu0 %720
    %722 = vrot.lane.b32.xlu0 %v717, 64
    %v723 = vpop.permute.xlu0 %722
    %v724 = vmul.f32 %v719, %v641
    %v725 = vmul.f32 %v717, %v721
    %v726 = vadd.f32 %v724, %v725
    %v727 = vtanh.pop %v726
    %v728 = vmul.f32 %v723, %v727
    %729 = vmatprep.subr.mxu0 0.0
    %730 = vmatpush1.msra.mxu0 %v213
    %731 = vmatprep.subr.mxu0 0.0
    %732 = vmatpush1.msra.mxu0 %v212
    %733 = vmatprep.subr.mxu0 0.0
    %734 = vmatpush1.msra.mxu0 %v211
    %735 = vmatprep.subr.mxu0 0.0
    %736 = vmatpush1.msra.mxu0 %v210
    %737 = vmatprep.subr.mxu0 0.0
    %738 = vmatpush1.msra.mxu0 %v209
    %739 = vmatprep.subr.mxu0 0.0
    %740 = vmatpush1.msra.mxu0 %v208
    %741 = vmatprep.subr.mxu0 0.0
    %742 = vmatpush1.msra.mxu0 %v207
    %743 = vmatprep.subr.mxu0 0.0
    %744 = vmatpush1.msra.mxu0 %v206
    %745 = vmatprep.subr.mxu0 0.0
    %746 = vmatpush1.msra.mxu0 %v205
    %747 = vmatprep.subr.mxu0 0.0
    %748 = vmatpush1.msra.mxu0 %v204
    %749 = vmatprep.subr.mxu0 0.0
    %750 = vmatpush1.msra.mxu0 %v203
    %751 = vmatprep.subr.mxu0 0.0
    %752 = vmatpush1.msra.mxu0 %v202
    %753 = vmatprep.subr.mxu0 0.0
    %754 = vmatpush1.msra.mxu0 %v201
    %755 = vmatprep.subr.mxu0 0.0
    %756 = vmatpush1.msra.mxu0 %v200
    %757 = vmatprep.subr.mxu0 0.0
    %758 = vmatpush1.msra.mxu0 %v199
    %759 = vmatprep.subr.mxu0 0.0
    %760 = vmatpush1.msra.mxu0 %v198
    %761 = vmatprep.subr.mxu0 0.0
    %762 = vmatpush2.msra.mxu0 0.0
    %763 = vmatprep.subr.mxu0 0.0
    %764 = vmatpush2.msra.mxu0 0.0
    %765 = vmatprep.subr.mxu0 0.0
    %766 = vmatpush2.msra.mxu0 0.0
    %767 = vmatprep.subr.mxu0 0.0
    %768 = vmatpush2.msra.mxu0 0.0
    %769 = vmatprep.subr.mxu0 0.0
    %770 = vmatpush2.msra.mxu0 0.0
    %771 = vmatprep.subr.mxu0 0.0
    %772 = vmatpush2.msra.mxu0 0.0
    %773 = vmatprep.subr.mxu0 0.0
    %774 = vmatpush2.msra.mxu0 0.0
    %775 = vmatprep.subr.mxu0 0.0
    %776 = vmatpush2.msra.mxu0 0.0
    %777 = vmatprep.subr.mxu0 0.0
    %778 = vmatpush2.msra.mxu0 0.0
    %779 = vmatprep.subr.mxu0 0.0
    %780 = vmatpush2.msra.mxu0 0.0
    %781 = vmatprep.subr.mxu0 0.0
    %782 = vmatpush2.msra.mxu0 0.0
    %783 = vmatprep.subr.mxu0 0.0
    %784 = vmatpush2.msra.mxu0 0.0
    %785 = vmatprep.subr.mxu0 0.0
    %786 = vmatpush2.msra.mxu0 0.0
    %787 = vmatprep.subr.mxu0 0.0
    %788 = vmatpush2.msra.mxu0 0.0
    %789 = vmatprep.subr.mxu0 0.0
    %790 = vmatpush2.msra.mxu0 0.0
    %791 = vmatprep.subr.mxu0 0.0
    %792 = vmatpush2.msra.mxu0 0.0
    %793 = vmatprep.mubr.f32.mxu0 0.0
    %794 = vmatmul.mubr.f32.gmra.mxu0 %v728
    %v795 = vpop.f32.mrf.mxu0
    %v796 = vadd.f32 0.0, %v795
    %v797 = vpop.f32.mrf.mxu0
    %798 = vdwg.mxu0
    %v799 = vadd.f32 %v190, %v796
    %v800 = vtanh.pop %v799
    %v801 = vmul.f32 %v800, %v217
    %v802 = vadd.f32 %v801, %v218
    %803 = vrot.lane.b32.xlu0 %v802, 96
    %v804 = vpop.permute.xlu0 %803
    %805 = vrot.lane.b32.xlu0 %v802, 32
    %v806 = vpop.permute.xlu0 %805
    %807 = vrot.lane.b32.xlu0 %v802, 64
    %v808 = vpop.permute.xlu0 %807
    %v809 = vmul.f32 %v804, %v726
    %v810 = vmul.f32 %v802, %v806
    %v811 = vadd.f32 %v809, %v810
    %v812 = vtanh.pop %v811
    %v813 = vmul.f32 %v808, %v812
    %814 = vmatprep.subr.mxu0 0.0
    %815 = vmatpush1.msra.mxu0 %v213
    %816 = vmatprep.subr.mxu0 0.0
    %817 = vmatpush1.msra.mxu0 %v212
    %818 = vmatprep.subr.mxu0 0.0
    %819 = vmatpush1.msra.mxu0 %v211
    %820 = vmatprep.subr.mxu0 0.0
    %821 = vmatpush1.msra.mxu0 %v210
    %822 = vmatprep.subr.mxu0 0.0
    %823 = vmatpush1.msra.mxu0 %v209
    %824 = vmatprep.subr.mxu0 0.0
    %825 = vmatpush1.msra.mxu0 %v208
    %826 = vmatprep.subr.mxu0 0.0
    %827 = vmatpush1.msra.mxu0 %v207
    %828 = vmatprep.subr.mxu0 0.0
    %829 = vmatpush1.msra.mxu0 %v206
    %830 = vmatprep.subr.mxu0 0.0
    %831 = vmatpush1.msra.mxu0 %v205
    %832 = vmatprep.subr.mxu0 0.0
    %833 = vmatpush1.msra.mxu0 %v204
    %834 = vmatprep.subr.mxu0 0.0
    %835 = vmatpush1.msra.mxu0 %v203
    %836 = vmatprep.subr.mxu0 0.0
    %837 = vmatpush1.msra.mxu0 %v202
    %838 = vmatprep.subr.mxu0 0.0
    %839 = vmatpush1.msra.mxu0 %v201
    %840 = vmatprep.subr.mxu0 0.0
    %841 = vmatpush1.msra.mxu0 %v200
    %842 = vmatprep.subr.mxu0 0.0
    %843 = vmatpush1.msra.mxu0 %v199
    %844 = vmatprep.subr.mxu0 0.0
    %845 = vmatpush1.msra.mxu0 %v198
    %846 = vmatprep.subr.mxu0 0.0
    %847 = vmatpush2.msra.mxu0 0.0
    %848 = vmatprep.subr.mxu0 0.0
    %849 = vmatpush2.msra.mxu0 0.0
    %850 = vmatprep.subr.mxu0 0.0
    %851 = vmatpush2.msra.mxu0 0.0
    %852 = vmatprep.subr.mxu0 0.0
    %853 = vmatpush2.msra.mxu0 0.0
    %854 = vmatprep.subr.mxu0 0.0
    %855 = vmatpush2.msra.mxu0 0.0
    %856 = vmatprep.subr.mxu0 0.0
    %857 = vmatpush2.msra.mxu0 0.0
    %858 = vmatprep.subr.mxu0 0.0
    %859 = vmatpush2.msra.mxu0 0.0
    %860 = vmatprep.subr.mxu0 0.0
    %861 = vmatpush2.msra.mxu0 0.0
    %862 = vmatprep.subr.mxu0 0.0
    %863 = vmatpush2.msra.mxu0 0.0
    %864 = vmatprep.subr.mxu0 0.0
    %865 = vmatpush2.msra.mxu0 0.0
    %866 = vmatprep.subr.mxu0 0.0
    %867 = vmatpush2.msra.mxu0 0.0
    %868 = vmatprep.subr.mxu0 0.0
    %869 = vmatpush2.msra.mxu0 0.0
    %870 = vmatprep.subr.mxu0 0.0
    %871 = vmatpush2.msra.mxu0 0.0
    %872 = vmatprep.subr.mxu0 0.0
    %873 = vmatpush2.msra.mxu0 0.0
    %874 = vmatprep.subr.mxu0 0.0
    %875 = vmatpush2.msra.mxu0 0.0
    %876 = vmatprep.subr.mxu0 0.0
    %877 = vmatpush2.msra.mxu0 0.0
    %878 = vmatprep.mubr.f32.mxu0 0.0
    %879 = vmatmul.mubr.f32.gmra.mxu0 %v813
    %v880 = vpop.f32.mrf.mxu0
    %v881 = vadd.f32 0.0, %v880
    %v882 = vpop.f32.mrf.mxu0
    %883 = vdwg.mxu0
    %v884 = vadd.f32 %v195, %v881
    %v885 = vtanh.pop %v884
    %v886 = vmul.f32 %v885, %v217
    %v887 = vadd.f32 %v886, %v218
    %888 = vrot.lane.b32.xlu0 %v887, 96
    %v889 = vpop.permute.xlu0 %888
    %890 = vrot.lane.b32.xlu0 %v887, 32
    %v891 = vpop.permute.xlu0 %890
    %892 = vrot.lane.b32.xlu0 %v887, 64
    %v893 = vpop.permute.xlu0 %892
    %v894 = vmul.f32 %v889, %v811
    %v895 = vmul.f32 %v887, %v891
    %v896 = vadd.f32 %v894, %v895
    %v897 = vtanh.pop %v896
    %v898 = vmul.f32 %v893, %v897
    %v899 = vld [vmem:[#allocation4] sm:$0xff]
    %v900 = vld [vmem:[#allocation4 + $0x8] sm:$0xff]
    %v901 = vld [vmem:[#allocation4 + $0x10] sm:$0xff]
    %v902 = vld [vmem:[#allocation4 + $0x18] sm:$0xff]
    %v903 = vld [vmem:[#allocation4 + $0x20] sm:$0xff]
    %v904 = vld [vmem:[#allocation4 + $0x28] sm:$0xff]
    %v905 = vld [vmem:[#allocation4 + $0x30] sm:$0xff]
    %v906 = vld [vmem:[#allocation4 + $0x38] sm:$0xff]
    %v907 = vld [vmem:[#allocation4 + $0x40] sm:$0xff]
    %v908 = vld [vmem:[#allocation4 + $0x48] sm:$0xff]
    %v909 = vld [vmem:[#allocation4 + $0x50] sm:$0xff]
    %v910 = vld [vmem:[#allocation4 + $0x58] sm:$0xff]
    %v911 = vld [vmem:[#allocation4 + $0x60] sm:$0xff]
    %v912 = vld [vmem:[#allocation4 + $0x68] sm:$0xff]
    %v913 = vld [vmem:[#allocation4 + $0x70] sm:$0xff]
    %v914 = vld [vmem:[#allocation4 + $0x78] sm:$0xff]
    %v915 = vld [vmem:[%s5] sm:$0x1]
    %v917 = vlaneseq
    %v918 = vshrl.u32 %v917, 7
    %v919 = vsub.s32 0, %v918
    %v920 = vrot.slane %v915, %v919
    %922 = vmatprep.subr.mxu0 0.0
    %923 = vmatpush1.msra.mxu0 %v914
    %924 = vmatprep.subr.mxu0 0.0
    %925 = vmatpush1.msra.mxu0 %v913
    %926 = vmatprep.subr.mxu0 0.0
    %927 = vmatpush1.msra.mxu0 %v912
    %928 = vmatprep.subr.mxu0 0.0
    %929 = vmatpush1.msra.mxu0 %v911
    %930 = vmatprep.subr.mxu0 0.0
    %931 = vmatpush1.msra.mxu0 %v910
    %932 = vmatprep.subr.mxu0 0.0
    %933 = vmatpush1.msra.mxu0 %v909
    %934 = vmatprep.subr.mxu0 0.0
    %935 = vmatpush1.msra.mxu0 %v908
    %936 = vmatprep.subr.mxu0 0.0
    %937 = vmatpush1.msra.mxu0 %v907
    %938 = vmatprep.subr.mxu0 0.0
    %939 = vmatpush1.msra.mxu0 %v906
    %940 = vmatprep.subr.mxu0 0.0
    %941 = vmatpush1.msra.mxu0 %v905
    %942 = vmatprep.subr.mxu0 0.0
    %943 = vmatpush1.msra.mxu0 %v904
    %944 = vmatprep.subr.mxu0 0.0
    %945 = vmatpush1.msra.mxu0 %v903
    %946 = vmatprep.subr.mxu0 0.0
    %947 = vmatpush1.msra.mxu0 %v902
    %948 = vmatprep.subr.mxu0 0.0
    %949 = vmatpush1.msra.mxu0 %v901
    %950 = vmatprep.subr.mxu0 0.0
    %951 = vmatpush1.msra.mxu0 %v900
    %952 = vmatprep.subr.mxu0 0.0
    %953 = vmatpush1.msra.mxu0 %v899
    %954 = vmatprep.subr.mxu0 0.0
    %955 = vmatpush2.msra.mxu0 0.0
    %956 = vmatprep.subr.mxu0 0.0
    %957 = vmatpush2.msra.mxu0 0.0
    %958 = vmatprep.subr.mxu0 0.0
    %959 = vmatpush2.msra.mxu0 0.0
    %960 = vmatprep.subr.mxu0 0.0
    %961 = vmatpush2.msra.mxu0 0.0
    %962 = vmatprep.subr.mxu0 0.0
    %963 = vmatpush2.msra.mxu0 0.0
    %964 = vmatprep.subr.mxu0 0.0
    %965 = vmatpush2.msra.mxu0 0.0
    %966 = vmatprep.subr.mxu0 0.0
    %967 = vmatpush2.msra.mxu0 0.0
    %968 = vmatprep.subr.mxu0 0.0
    %969 = vmatpush2.msra.mxu0 0.0
    %970 = vmatprep.subr.mxu0 0.0
    %971 = vmatpush2.msra.mxu0 0.0
    %972 = vmatprep.subr.mxu0 0.0
    %973 = vmatpush2.msra.mxu0 0.0
    %974 = vmatprep.subr.mxu0 0.0
    %975 = vmatpush2.msra.mxu0 0.0
    %976 = vmatprep.subr.mxu0 0.0
    %977 = vmatpush2.msra.mxu0 0.0
    %978 = vmatprep.subr.mxu0 0.0
    %979 = vmatpush2.msra.mxu0 0.0
    %980 = vmatprep.subr.mxu0 0.0
    %981 = vmatpush2.msra.mxu0 0.0
    %982 = vmatprep.subr.mxu0 0.0
    %983 = vmatpush2.msra.mxu0 0.0
    %984 = vmatprep.subr.mxu0 0.0
    %985 = vmatpush2.msra.mxu0 0.0
    %986 = vmatprep.mubr.f32.mxu0 0.0
    %987 = vmatmul.mubr.f32.gmra.mxu0 %v303
    %v988 = vpop.f32.mrf.mxu0
    %v989 = vadd.f32 %v920, %v988
    %v990 = vpop.f32.mrf.mxu0
    %991 = vmatprep.mubr.f32.mxu0 0.0
    %992 = vmatmul.mubr.f32.gmra.mxu0 %v388
    %v993 = vpop.f32.mrf.mxu0
    %v994 = vadd.f32 %v920, %v993
    %v995 = vpop.f32.mrf.mxu0
    %996 = vmatprep.mubr.f32.mxu0 0.0
    %997 = vmatmul.mubr.f32.gmra.mxu0 %v473
    %v998 = vpop.f32.mrf.mxu0
    %v999 = vadd.f32 %v920, %v998
    %v1000 = vpop.f32.mrf.mxu0
    %1001 = vmatprep.mubr.f32.mxu0 0.0
    %1002 = vmatmul.mubr.f32.gmra.mxu0 %v558
    %v1003 = vpop.f32.mrf.mxu0
    %v1004 = vadd.f32 %v920, %v1003
    %v1005 = vpop.f32.mrf.mxu0
    %1006 = vmatprep.mubr.f32.mxu0 0.0
    %1007 = vmatmul.mubr.f32.gmra.mxu0 %v643
    %v1008 = vpop.f32.mrf.mxu0
    %v1009 = vadd.f32 %v920, %v1008
    %v1010 = vpop.f32.mrf.mxu0
    %1011 = vmatprep.mubr.f32.mxu0 0.0
    %1012 = vmatmul.mubr.f32.gmra.mxu0 %v728
    %v1013 = vpop.f32.mrf.mxu0
    %v1014 = vadd.f32 %v920, %v1013
    %v1015 = vpop.f32.mrf.mxu0
    %1016 = vmatprep.mubr.f32.mxu0 0.0
    %1017 = vmatmul.mubr.f32.gmra.mxu0 %v813
    %v1018 = vpop.f32.mrf.mxu0
    %v1019 = vadd.f32 %v920, %v1018
    %v1020 = vpop.f32.mrf.mxu0
    %1021 = vmatprep.mubr.f32.mxu0 0.0
    %1022 = vmatmul.mubr.f32.gmra.mxu0 %v898
    %v1023 = vpop.f32.mrf.mxu0
    %v1024 = vadd.f32 %v920, %v1023
    %v1025 = vpop.f32.mrf.mxu0
    %1026 = vdwg.mxu0
    %v1027 = vmax.f32 %v989, 0.0
    %v1028 = vmax.f32 %v994, 0.0
    %v1029 = vmax.f32 %v999, 0.0
    %v1030 = vmax.f32 %v1004, 0.0
    %v1031 = vmax.f32 %v1009, 0.0
    %v1032 = vmax.f32 %v1014, 0.0
    %v1033 = vmax.f32 %v1019, 0.0
    %v1034 = vmax.f32 %v1024, 0.0
    %v1035 = vand.u32 2147483647, %v989
    %v1036 = vand.u32 2147483647, %v994
    %v1037 = vand.u32 2147483647, %v999
    %v1038 = vand.u32 2147483647, %v1004
    %v1039 = vand.u32 2147483647, %v1009
    %v1040 = vand.u32 2147483647, %v1014
    %v1041 = vand.u32 2147483647, %v1019
    %v1042 = vand.u32 2147483647, %v1024
    %v1043 = vsub.f32 0.0, %v1035
    %v1044 = vsub.f32 0.0, %v1036
    %v1045 = vsub.f32 0.0, %v1037
    %v1046 = vsub.f32 0.0, %v1038
    %v1047 = vsub.f32 0.0, %v1039
    %v1048 = vsub.f32 0.0, %v1040
    %v1049 = vsub.f32 0.0, %v1041
    %v1050 = vsub.f32 0.0, %v1042
    %v1051 = vmul.f32 %v1043, 1.442695
    %v1052 = vpow.pop %v1051
    %v1053 = vmul.f32 %v1044, 1.442695
    %v1054 = vpow.pop %v1053
    %v1055 = vmul.f32 %v1045, 1.442695
    %v1056 = vpow.pop %v1055
    %v1057 = vmul.f32 %v1046, 1.442695
    %v1058 = vpow.pop %v1057
    %v1059 = vmul.f32 %v1047, 1.442695
    %v1060 = vpow.pop %v1059
    %v1061 = vmul.f32 %v1048, 1.442695
    %v1062 = vpow.pop %v1061
    %v1063 = vmul.f32 %v1049, 1.442695
    %v1064 = vpow.pop %v1063
    %v1065 = vmul.f32 %v1050, 1.442695
    %v1066 = vpow.pop %v1065
    %v1067 = vadd.f32 %v1052, 1.0
    %v1068 = vadd.f32 %v1054, 1.0
    %v1069 = vadd.f32 %v1056, 1.0
    %v1070 = vadd.f32 %v1058, 1.0
    %v1071 = vadd.f32 %v1060, 1.0
    %v1072 = vadd.f32 %v1062, 1.0
    %v1073 = vadd.f32 %v1064, 1.0
    %v1074 = vadd.f32 %v1066, 1.0
    %v1075 = vlog2.pop %v1067
    %v1076 = vmul.f32 %v1075, 0.6931472
    %v1077 = vlog2.pop %v1068
    %v1078 = vmul.f32 %v1077, 0.6931472
    %v1079 = vlog2.pop %v1069
    %v1080 = vmul.f32 %v1079, 0.6931472
    %v1081 = vlog2.pop %v1070
    %v1082 = vmul.f32 %v1081, 0.6931472
    %v1083 = vlog2.pop %v1071
    %v1084 = vmul.f32 %v1083, 0.6931472
    %v1085 = vlog2.pop %v1072
    %v1086 = vmul.f32 %v1085, 0.6931472
    %v1087 = vlog2.pop %v1073
    %v1088 = vmul.f32 %v1087, 0.6931472
    %v1089 = vlog2.pop %v1074
    %v1090 = vmul.f32 %v1089, 0.6931472
    %v1091 = vadd.f32 %v1027, %v1076
    %v1092 = vadd.f32 %v1028, %v1078
    %v1093 = vadd.f32 %v1029, %v1080
    %v1094 = vadd.f32 %v1030, %v1082
    %v1095 = vadd.f32 %v1031, %v1084
    %v1096 = vadd.f32 %v1032, %v1086
    %v1097 = vadd.f32 %v1033, %v1088
    %v1098 = vadd.f32 %v1034, %v1090
    %v1099 = vsub.f32 0.0, %v1091
    %v1100 = vsub.f32 0.0, %v1092
    %v1101 = vsub.f32 0.0, %v1093
    %v1102 = vsub.f32 0.0, %v1094
    %v1103 = vsub.f32 0.0, %v1095
    %v1104 = vsub.f32 0.0, %v1096
    %v1105 = vsub.f32 0.0, %v1097
    %v1106 = vsub.f32 0.0, %v1098
    %1107 = vst [vmem:[%s6] sm:$0xff] %v1099
    %1108 = vst [vmem:[%s6 + $0x8] sm:$0xff] %v1100
    %1109 = vst [vmem:[%s6 + $0x10] sm:$0xff] %v1101
    %1110 = vst [vmem:[%s6 + $0x18] sm:$0xff] %v1102
    %1111 = vst [vmem:[%s6 + $0x20] sm:$0xff] %v1103
    %1112 = vst [vmem:[%s6 + $0x28] sm:$0xff] %v1104
    %1113 = vst [vmem:[%s6 + $0x30] sm:$0xff] %v1105
    %1114 = vst [vmem:[%s6 + $0x38] sm:$0xff] %v1106
    // Predicated region
    $region34: #{laughter_lstm_forward.1} parent=1 // pred_check
      _
    $region35: #{laughter_lstm_forward.1} parent=1 // pred_check_branch
      %1116 = sbr.rel (0) target = $region37
    $region36: #{laughter_lstm_forward.1} parent=1 // pred_region
      _
    $region37: #{laughter_lstm_forward.1} parent=1 // pred_fallthru
      _
    // Predicated region
    $region38: #{laughter_lstm_forward.1} parent=1 // pred_check
      _
    $region39: #{laughter_lstm_forward.1} parent=1 // pred_check_branch
      %1118 = sbr.rel (0) target = $region41
    $region40: #{laughter_lstm_forward.1} parent=1 // pred_region
      _
    $region41: #{laughter_lstm_forward.1} parent=1 // pred_fallthru
      _
    %1119 = vsyncpa [#allocation3], 1
    %1120 = vsyncpa [#allocation5], 1

</llo_original>
